<compile_context>
chip_gen: v7x
topology: tpu7x:2x2x1
jax: 0.10.0
libtpu: 0.0.40
codegen_flags: <defaults>
</compile_context>

<pallas_src>
import functools

import numpy as np

import jax
import jax.numpy as jnp
from jax.experimental import pallas as pl
from jax.experimental.pallas import tpu as pltpu


# ---------------------------------------------------------------------------
# Static network configuration
# ---------------------------------------------------------------------------
# 12 unique conv layers (block3_conv3 exists in __init__ but is never used).
CONV_CH = [
    (3, 64), (64, 64),                      # block 1
    (64, 128), (128, 128),                  # block 2
    (128, 256), (256, 256),                 # block 3 (conv2 reused twice)
    (256, 512), (512, 512), (512, 512),     # block 4
    (512, 512), (512, 256), (256, 1),       # block 5
]
# per block: (conv slots in application order, post-BN activation)
BLOCKS = [
    ((0, 1), "relu"),
    ((2, 3), "relu"),
    ((4, 5, 5), "relu"),      # conv2 applied twice, conv3 unused (as in forward)
    ((6, 7, 8), "relu"),
    ((9, 10, 11), "sigmoid"),
]
N_CONV = len(CONV_CH)
N_BLK = len(BLOCKS)
BN_EPS = 1e-5


def _spatial_sizes(H0, W0):
    sizes = []
    H, W = H0, W0
    for _ in range(N_BLK):
        sizes.append((H, W))
        H, W = H // 2, W // 2
    return sizes


def _interior_mask(N, H, W):
    """(Mp, 1) f32: 1.0 at valid interior positions of the flat-padded map."""
    Hp, Wp = H + 2, W + 2
    m = np.zeros((N, Hp, Wp, 1), np.float32)
    m[:, 1:H + 1, 1:W + 1, :] = 1.0
    return jnp.asarray(m.reshape(N * Hp * Wp, 1))


# ---------------------------------------------------------------------------
# Row-shift helper (direction-safe wrapper around pltpu.roll)
# ---------------------------------------------------------------------------
_ROLL_NUMPY = True  # does pltpu.roll follow np.roll? fixed up by _init_roll_convention


def _roll_probe_kernel(x_ref, o_ref):
    o_ref[...] = pltpu.roll(x_ref[...], 1, axis=0)


def _init_roll_convention():
    """One cheap on-device probe so _shift_rows is correct for either convention."""
    global _ROLL_NUMPY
    x = jnp.arange(8, dtype=jnp.float32)[:, None] * jnp.ones((1, 128), jnp.float32)
    y = pl.pallas_call(
        _roll_probe_kernel,
        out_shape=jax.ShapeDtypeStruct((8, 128), jnp.float32),
        in_specs=[pl.BlockSpec(memory_space=pltpu.MemorySpace.VMEM)],
        out_specs=pl.BlockSpec(memory_space=pltpu.MemorySpace.VMEM),
    )(x)
    _ROLL_NUMPY = bool(np.asarray(y)[0, 0] == 7.0)  # np.roll(x, 1)[0] == x[-1]


def _shift_rows(v, k):
    """out[r] = v[(r + k) % M]  (rows shifted toward lower indices by k)."""
    M = v.shape[0]
    k = k % M
    if k == 0:
        return v
    shift = (M - k) if _ROLL_NUMPY else k
    return pltpu.roll(v, shift, axis=0)


# ---------------------------------------------------------------------------
# The fused whole-network kernel
# ---------------------------------------------------------------------------
def _net_kernel(*refs, N, H0, W0):
    # ---- unpack refs (order must match the pallas_call below) ----
    it = iter(refs)
    x_ref = next(it)
    w_hbm = [next(it) for _ in range(N_CONV)]
    b_ref = [next(it) for _ in range(N_CONV)]
    g_ref = [next(it) for _ in range(N_BLK)]
    bt_ref = [next(it) for _ in range(N_BLK)]
    m_ref = [next(it) for _ in range(N_BLK)]
    o_ref = next(it)
    w_vmem = [next(it) for _ in range(N_CONV)]
    act_ref = [next(it) for _ in range(N_BLK - 1)]
    zs_ref = [next(it) for _ in range(N_BLK)]
    sem = next(it)

    # ---- stream all conv weights HBM -> VMEM up front; MXU work of earlier
    #      layers hides the DMA of the big late-block weights ----
    for s in range(N_CONV):
        pltpu.make_async_copy(w_hbm[s], w_vmem[s], sem.at[s]).start()

    waited = set()

    def wait_weights(s):
        if s not in waited:  # block3 reuses slot 5: wait exactly once per DMA
            pltpu.make_async_copy(w_hbm[s], w_vmem[s], sem.at[s]).wait()
            waited.add(s)

    def conv3x3(x, s, Wp):
        """x: (Mp, Cin) bf16 flat-padded -> (Mp, Cout) f32 conv + bias.

        shift_rows(x, k) @ W == shift_rows(x @ W, k): all 9 tap matmuls read the
        same un-shifted bf16 operand; row shifts run on the XLU on f32 results.
        Circular wrap only touches padding rows, which are always masked later.
        """
        wait_weights(s)
        acc = None
        for dy in range(3):
            part = None
            for dx in range(3):
                r = jnp.dot(x, w_vmem[s][3 * dy + dx],
                            preferred_element_type=jnp.float32)
                r = _shift_rows(r, dx - 1)
                part = r if part is None else part + r
            part = _shift_rows(part, (dy - 1) * Wp)
            acc = part if acc is None else acc + part
        return acc + b_ref[s][...]

    x = x_ref[...]                                    # (Mp1, 3) bf16
    H, W = H0, W0
    for bi, (slots, act) in enumerate(BLOCKS):
        Hp, Wp = H + 2, W + 2
        Mp = N * Hp * Wp
        mask = m_ref[bi][...]                         # (Mp, 1) f32

        # intermediate convs: conv + bias + ReLU, padding rows re-zeroed
        for s in slots[:-1]:
            y = conv3x3(x, s, Wp)
            x = (jnp.maximum(y, 0.0) * mask).astype(jnp.bfloat16)

        # last conv: + BatchNorm(batch stats) + activation + 2x2/2 max-pool
        y = conv3x3(x, slots[-1], Wp)                 # (Mp, C) f32
        inv_cnt = 1.0 / float(N * H * W)
        mean = jnp.sum(y * mask, axis=0, keepdims=True) * inv_cnt
        yc = (y - mean) * mask
        var = jnp.sum(yc * yc, axis=0, keepdims=True) * inv_cnt   # biased var
        scale = g_ref[bi][...] * jax.lax.rsqrt(var + BN_EPS)
        z = (y - mean) * scale + bt_ref[bi][...]
        z = jnp.maximum(z, 0.0) if act == "relu" else jax.nn.sigmoid(z)

        # 2x2 window max anchored at every row: two XLU shifts + max
        zm = jnp.maximum(z, _shift_rows(z, 1))
        zm = jnp.maximum(zm, _shift_rows(zm, Wp))
        zs_ref[bi][...] = zm

        # stride-2 subsample into the next block's flat-padded layout (or the
        # final output).  Trip counts are tiny (<= 32 rows in total per block),
        # so a static loop with static offsets keeps every strided read simple.
        Ho, Wo = H // 2, W // 2
        Hq, Wq = Ho + 2, Wo + 2
        dst = act_ref[bi] if bi < N_BLK - 1 else o_ref
        dst[...] = jnp.zeros(dst.shape, dst.dtype)    # zero padding border once
        zs = zs_ref[bi]
        for n in range(N):
            for i in range(Ho):
                src = n * Hp * Wp + (2 * i + 1) * Wp + 1
                dst_row = n * Hq * Wq + (i + 1) * Wq + 1
                if Wo > 1:
                    row = zs[pl.ds(src, Wo, stride=2), :]
                else:
                    row = zs[pl.ds(src, 1), :]
                dst[pl.ds(dst_row, Wo), :] = row.astype(dst.dtype)

        if bi < N_BLK - 1:
            x = act_ref[bi][...].astype(jnp.bfloat16)  # cast once per block input
        H, W = Ho, Wo


# ---------------------------------------------------------------------------
# Wrapper: layout glue + pallas_call
# ---------------------------------------------------------------------------
def net_forward(x_nchw, params):
    N, _, H0, W0 = x_nchw.shape
    assert H0 % 32 == 0 and W0 % 32 == 0, "5 stride-2 pools need H, W % 32 == 0"

    # NCHW -> flat-padded NHWC bf16 (the only host-side glue in the network)
    x = jnp.transpose(x_nchw, (0, 2, 3, 1)).astype(jnp.bfloat16)
    x = jnp.pad(x, ((0, 0), (1, 1), (1, 1), (0, 0)))
    x = x.reshape(N * (H0 + 2) * (W0 + 2), -1)

    sizes = _spatial_sizes(H0, W0)
    masks = [_interior_mask(N, Hb, Wb) for Hb, Wb in sizes]

    Ho, Wo = H0 // 32, W0 // 32
    Mq = N * (Ho + 2) * (Wo + 2)

    vmem = pl.BlockSpec(memory_space=pltpu.MemorySpace.VMEM)
    hbm = pl.BlockSpec(memory_space=pl.ANY)
    in_specs = ([vmem]                       # x (flat-padded input)
                + [hbm] * N_CONV             # weights: stay in HBM, streamed
                + [vmem] * N_CONV            # biases
                + [vmem] * N_BLK             # BN gamma
                + [vmem] * N_BLK             # BN beta
                + [vmem] * N_BLK)            # interior masks

    scratch = [pltpu.VMEM((9, cin, cout), jnp.bfloat16) for cin, cout in CONV_CH]
    for bi in range(N_BLK - 1):              # next block's flat-padded input
        Hn, Wn = sizes[bi + 1]
        cout = CONV_CH[BLOCKS[bi][0][-1]][1]
        scratch.append(pltpu.VMEM((N * (Hn + 2) * (Wn + 2), cout), jnp.float32))
    for bi in range(N_BLK):                  # pre-subsample pooled-max buffers
        Hb, Wb = sizes[bi]
        cout = CONV_CH[BLOCKS[bi][0][-1]][1]
        scratch.append(pltpu.VMEM((N * (Hb + 2) * (Wb + 2), cout), jnp.float32))
    scratch.append(pltpu.SemaphoreType.DMA((N_CONV,)))

    kernel = functools.partial(_net_kernel, N=N, H0=H0, W0=W0)
    out_flat = pl.pallas_call(
        kernel,
        out_shape=jax.ShapeDtypeStruct((Mq, 1), jnp.float32),
        in_specs=in_specs,
        out_specs=vmem,
        scratch_shapes=scratch,
        compiler_params=pltpu.CompilerParams(
            vmem_limit_bytes=48 * 1024 * 1024),   # ~29 MiB used; fits v7x's 64 MiB
    )(x, *params["w"], *params["b"], *params["gamma"], *params["beta"], *masks)

    out = out_flat.reshape(N, Ho + 2, Wo + 2, 1)[:, 1:Ho + 1, 1:Wo + 1, :]
    return jnp.transpose(out, (0, 3, 1, 2))


# ---------------------------------------------------------------------------
# Deterministic synthetic parameters
# ---------------------------------------------------------------------------
def init_params(key):
    keys = jax.random.split(key, N_CONV + N_BLK)
    ws, bs = [], []
    for i, (cin, cout) in enumerate(CONV_CH):
        kw, kb = jax.random.split(keys[i])
        w = jax.random.normal(kw, (3, 3, cin, cout), jnp.float32) / np.sqrt(9 * cin)
        b = 0.01 * jax.random.normal(kb, (cout,), jnp.float32)
        ws.append(w.reshape(9, cin, cout).astype(jnp.bfloat16))   # tap-major, bf16
        bs.append(b.reshape(1, cout))
    gs, bts = [], []
    for k in range(N_BLK):
        cout = CONV_CH[BLOCKS[k][0][-1]][1]
        kg, kb = jax.random.split(keys[N_CONV + k])
        gs.append((1.0 + 0.1 * jax.random.normal(kg, (cout,), jnp.float32)).reshape(1, cout))
        bts.append((0.1 * jax.random.normal(kb, (cout,), jnp.float32)).reshape(1, cout))
    return {"w": ws, "b": bs, "gamma": gs, "beta": bts}


if __name__ == "__main__":
    _init_roll_convention()   # cheap on-device probe, before tracing the big kernel

    key = jax.random.PRNGKey(0)
    k_params, k_x = jax.random.split(key)
    params = init_params(k_params)
    # Spatial 32 so that 5 stride-2 pools reduce to 1x1 (matches the 5 blocks).
    x = jax.random.normal(k_x, (2, 3, 32, 32), jnp.float32)   # NCHW, as in PyTorch

    fwd = jax.jit(net_forward)
    out = jax.block_until_ready(fwd(x, params))
    assert out.shape == (2, 1, 1, 1), out.shape
    print("KERNEL_OK")
</pallas_src>

<mosaic_0001>
module attributes {stable_mosaic.version = 11 : i64} {
  func.func @_roll_probe_kernel(%arg0: memref<8x128xf32, #tpu.memory_space<vmem>>, %arg1: memref<8x128xf32, #tpu.memory_space<vmem>>) attributes {dimension_semantics = [], scalar_prefetch = 0 : i64, scratch_operands = 0 : i64, tpu.core_type = #tpu.core_type<tc>} {
    %c0 = arith.constant 0 : index
    %c0_0 = arith.constant 0 : index
    %0 = vector.load %arg0[%c0, %c0_0] : memref<8x128xf32, #tpu.memory_space<vmem>>, vector<8x128xf32>
    %c1_i32 = arith.constant 1 : i32
    %1 = tpu.dynamic_rotate %0 by %c1_i32 dim 0 : vector<8x128xf32>, i32 -> vector<8x128xf32>
    %c0_1 = arith.constant 0 : index
    %c0_2 = arith.constant 0 : index
    %2 = vector.load %arg1[%c0_1, %c0_2] : memref<8x128xf32, #tpu.memory_space<vmem>>, vector<8x128xf32>
    tpu.vector_store %arg1[%c0_1, %c0_2], %1 {strides = array<i32>} : memref<8x128xf32, #tpu.memory_space<vmem>>, vector<8x128xf32>,
    return
  }
}

</mosaic_0001>

<llo_original>
// kernel: tpu_custom_call.1
$region0: #{tpu_custom_call.1}
  #allocation0 [shape = 'u32[]', space=smem, size = 0x4, offset = 0x4, fixed_abs, tag = 'smem constant byte address 0x4 - core index']
  #allocation1 [shape = 'u32[144,128]{1,0:T(1,128)}', space=vmem, size = 0x12000, scoped, tag = 'internal scratch']
  %s0 = inlined_call_operand.hbm [shape: f32[8,128], index: 0, kind: input, shape index: {}]
  %s1 = inlined_call_operand.hbm [shape: f32[8,128], index: 1, kind: output, shape index: {}]
  %s2 = sld [smem:[#allocation0]]
  $region18: #{tpu_custom_call.1} parent=0
    _
  %s4 = ssub.s32 1, %s2
  %s5 = scalar_select 0, %s4, %s2
  $region1: #{tpu_custom_call.1} parent=0
    #allocation2 [shape = 'u8[4096]{0}', space=vmem, size = 0x1000, scoped, tag = 'input window, operand 0, single buffered']
    #allocation3 [shape = 's32[1]{0}', space=sflag, size = 0x4, scoped, tag = 'scoped memory for tpu_custom_call.1']
    #allocation4 [shape = 's32[1]{0}', space=sflag, size = 0x4, scoped, tag = 'scoped memory for tpu_custom_call.1']
    #allocation5 [shape = 'u8[4096]{0}', space=vmem, size = 0x1000, scoped, tag = 'output window, operand 0, single buffered']
    %6 = vsyncpa [#allocation3], 0
    %7 = vsyncpa [#allocation4], 0
    // Predicated region
    $region2: #{tpu_custom_call.1} parent=1 // pred_check
      _
    $region3: #{tpu_custom_call.1} parent=1 // pred_check_branch
      %9 = sbr.rel (0) target = $region5
    $region4: #{tpu_custom_call.1} parent=1 // pred_region
      %s11 = ssub.s32 128, 128
      %12 = vsyncadd [#allocation3], %s11
      %s14 = sshll.u32 [#allocation2], 4
      %s15 = int_to_ptr.vmem [resolvable:$true] %s14
      %17 = dma.hbm_to_vmem [thread:$0]  %s0, 128, %s15, [#allocation3]
    $region5: #{tpu_custom_call.1} parent=1 // pred_fallthru
      _
    // Predicated region
    $region6: #{tpu_custom_call.1} parent=1 // pred_check
      _
    $region7: #{tpu_custom_call.1} parent=1 // pred_check_branch
      %19 = sbr.rel (0) target = $region9
    $region8: #{tpu_custom_call.1} parent=1 // pred_region
      %20 = dma.done [#allocation3], 128
    $region9: #{tpu_custom_call.1} parent=1 // pred_fallthru
      _
    %v21 = vld [vmem:[#allocation2] sm:$0xff]
    %v22 = vrot.slane %v21, 7
    %23 = vst [vmem:[#allocation5] sm:$0xff] %v22
    // Predicated region
    $region10: #{tpu_custom_call.1} parent=1 // pred_check
      _
    $region11: #{tpu_custom_call.1} parent=1 // pred_check_branch
      %25 = sbr.rel (0) target = $region13
    $region12: #{tpu_custom_call.1} parent=1 // pred_region
      %s27 = ssub.s32 128, 128
      %28 = vsyncadd [#allocation4], %s27
      %s30 = sshll.u32 [#allocation5], 4
      %s31 = int_to_ptr.vmem [resolvable:$true] %s30
      %33 = dma.vmem_to_hbm [thread:$0]  %s31, 128, %s1, [#allocation4]
    $region13: #{tpu_custom_call.1} parent=1 // pred_fallthru
      _
    // Predicated region
    $region14: #{tpu_custom_call.1} parent=1 // pred_check
      _
    $region15: #{tpu_custom_call.1} parent=1 // pred_check_branch
      %35 = sbr.rel (0) target = $region17
    $region16: #{tpu_custom_call.1} parent=1 // pred_region
      %36 = dma.done [#allocation4], 128
    $region17: #{tpu_custom_call.1} parent=1 // pred_fallthru
      _
    %37 = vsyncpa [#allocation3], 1
    %38 = vsyncpa [#allocation4], 1

</llo_original>
